<compile_context>
chip_gen: v7x
topology: tpu7x:2x2x1
jax: 0.10.0
libtpu: 0.0.40
codegen_flags: <defaults>
</compile_context>

<pallas_src>
import jax
import jax.numpy as jnp
from jax import lax
from jax.experimental import pallas as pl
from jax.experimental.pallas import tpu as pltpu


def mlp_kernel(x_ref,                       # (TILE_B, 6)   natural (batch, feature) tile, f32
               w1_ref, b1_ref,              # (28, 6) bf16, (28, 1) f32
               w2_ref, b2_ref,              # (29, 28),     (29, 1)
               w3_ref, b3_ref,              # (30, 29),     (30, 1)
               w4_ref, b4_ref,              # (1, 30),      (1, 1)
               o_ref):                      # (1, TILE_B)   feature-major output tile, f32
    """Fused 4-layer MLP forward on one batch tile; batch ends up on lanes."""
    x = x_ref[...].astype(jnp.bfloat16)                               # (T, 6)

    # Layer 1: (28, T) = w1 @ x^T  (NT contraction — transpose folds into the
    # MXU stationary-operand load; no XLU transpose, no wrapper x.T).
    h = lax.dot_general(w1_ref[...], x, (((1,), (1,)), ((), ())),
                        preferred_element_type=jnp.float32)           # (28, T)
    h = jnp.maximum(h + b1_ref[...], 0.0).astype(jnp.bfloat16)

    h = jnp.dot(w2_ref[...], h, preferred_element_type=jnp.float32)   # (29, T)
    h = jnp.maximum(h + b2_ref[...], 0.0).astype(jnp.bfloat16)

    h = jnp.dot(w3_ref[...], h, preferred_element_type=jnp.float32)   # (30, T)
    h = jnp.maximum(h + b3_ref[...], 0.0).astype(jnp.bfloat16)

    h = jnp.dot(w4_ref[...], h, preferred_element_type=jnp.float32)   # (1, T)
    o_ref[...] = (h + b4_ref[...]).astype(o_ref.dtype)


def _round_up(x, m):
    return ((x + m - 1) // m) * m


_MAX_TILE = 16384  # keeps the lane-padded (T,6) double buffer + intermediates
                   # well under v7x's 64 MiB VMEM; v6e could go higher.


def _choose_tile(batch, tile_b):
    tile = max(128, min(int(tile_b), _MAX_TILE))
    tile -= tile % (512 if tile >= 512 else 128)      # 512-align large tiles
    if batch <= tile:
        if batch >= 1024:
            # Split so the grid has >= 2 steps and ("parallel",) shards the
            # batch across both TensorCores on v7x.
            tile = _round_up(pl.cdiv(batch, 2), 128)
        else:
            # Single full-array block (always legal, no wasted lanes).
            tile = batch
    return tile


def mlp_forward(x, params, *, tile_b=8192):
    """x: (B, 6) float32 (natural PyTorch layout). Returns (B, 1) float32."""
    B, F = x.shape
    assert F == 6, F

    tile = _choose_tile(B, tile_b)
    grid = (pl.cdiv(B, tile),)

    # Tiny weights: cast to bf16 once, keep VMEM-resident via constant maps.
    w = [params[f"w{i}"].astype(jnp.bfloat16) for i in range(1, 5)]
    b = [params[f"b{i}"].astype(jnp.float32) for i in range(1, 5)]

    def resident(a):
        return pl.BlockSpec(a.shape, lambda i: (0, 0))

    args = (x, w[0], b[0], w[1], b[1], w[2], b[2], w[3], b[3])
    in_specs = [pl.BlockSpec((tile, 6), lambda i: (i, 0))]
    in_specs += [resident(a) for a in args[1:]]

    # VMEM budget: x block lane-pads (T,6)->(T,128) f32 = 512 B/row x 2 bufs,
    # out (1,T) f32 = 32 B/row x 2, plus ~1 KiB/row of f32/bf16 intermediates.
    vmem_limit = max(16 << 20, min(2048 * tile + (4 << 20), 64 << 20))

    out = pl.pallas_call(
        mlp_kernel,
        out_shape=jax.ShapeDtypeStruct((1, B), jnp.float32),
        grid=grid,
        in_specs=in_specs,
        out_specs=pl.BlockSpec((1, tile), lambda i: (0, i)),
        compiler_params=pltpu.CompilerParams(
            dimension_semantics=("parallel",),        # megacore-shard batch
            vmem_limit_bytes=vmem_limit,
        ),
    )(*args)

    return out.reshape(B, 1)   # (1, B) -> (B, 1): identical row-major layout


def init_params(key):
    """nn.Linear-style init, PyTorch layout: W (out, in), b (out, 1)."""
    dims = [(6, 28), (28, 29), (29, 30), (30, 1)]
    params = {}
    for i, (fan_in, fan_out) in enumerate(dims, start=1):
        key, kw, kb = jax.random.split(key, 3)
        bound = 1.0 / jnp.sqrt(float(fan_in))
        params[f"w{i}"] = jax.random.uniform(
            kw, (fan_out, fan_in), jnp.float32, -bound, bound)
        params[f"b{i}"] = jax.random.uniform(
            kb, (fan_out, 1), jnp.float32, -bound, bound)
    return params


def mlp_reference(x, params):
    """Pure-JAX reference (PyTorch convention, full-f32 matmul precision)."""
    hp = jax.lax.Precision.HIGHEST
    h = x
    for i in range(1, 5):
        w, b = params[f"w{i}"], params[f"b{i}"]
        h = jnp.dot(h, w.T, precision=hp) + b.T
        if i < 4:
            h = jnp.maximum(h, 0.0)
    return h


if __name__ == "__main__":
    key = jax.random.PRNGKey(0)
    key, kx = jax.random.split(key)

    params = init_params(key)

    # Small single-block case (tile == batch, full-array blocks).
    batch = 8
    x = jax.random.normal(kx, (batch, 6), dtype=jnp.float32)
    out = jax.block_until_ready(mlp_forward(x, params))
    ref = mlp_reference(x, params)
    assert out.shape == (batch, 1), out.shape
    # Tolerance sized for explicit bf16 matmuls (f32 accumulation) vs the
    # Precision.HIGHEST f32 reference.
    assert jnp.allclose(out, ref, atol=2e-2, rtol=2e-2), "mismatch vs reference"

    # Multi-step grid with a ragged last block (300 rows, 256-row tiles):
    # exercises the boundary-masking path (no padding, no output slice).
    key, kx2 = jax.random.split(key)
    batch2 = 300
    x2 = jax.random.normal(kx2, (batch2, 6), dtype=jnp.float32)
    out2 = jax.block_until_ready(mlp_forward(x2, params, tile_b=256))
    ref2 = mlp_reference(x2, params)
    assert out2.shape == (batch2, 1), out2.shape
    assert jnp.allclose(out2, ref2, atol=2e-2, rtol=2e-2), "mismatch vs reference (tiled)"

    print("KERNEL_OK")
</pallas_src>

<mosaic_0001>
module attributes {stable_mosaic.version = 11 : i64} {
  func.func @mlp_kernel(%arg0: i32, %arg1: memref<8x6xf32, #tpu.memory_space<vmem>>, %arg2: memref<28x6xbf16, #tpu.memory_space<vmem>>, %arg3: memref<28x1xf32, #tpu.memory_space<vmem>>, %arg4: memref<29x28xbf16, #tpu.memory_space<vmem>>, %arg5: memref<29x1xf32, #tpu.memory_space<vmem>>, %arg6: memref<30x29xbf16, #tpu.memory_space<vmem>>, %arg7: memref<30x1xf32, #tpu.memory_space<vmem>>, %arg8: memref<1x30xbf16, #tpu.memory_space<vmem>>, %arg9: memref<1x1xf32, #tpu.memory_space<vmem>>, %arg10: memref<1x8xf32, #tpu.memory_space<vmem>>) attributes {dimension_semantics = [#tpu.dimension_semantics<parallel>], iteration_bounds = array<i64: 1>, scalar_prefetch = 0 : i64, scratch_operands = 0 : i64, tpu.core_type = #tpu.core_type<tc>, window_params = [{transform_indices = @transform_0, window_bounds = array<i64: 8, 6>}, {pipeline_mode = #tpu.pipeline_mode<synchronous>, transform_indices = @transform_1, window_bounds = array<i64: 28, 6>}, {pipeline_mode = #tpu.pipeline_mode<synchronous>, transform_indices = @transform_2, window_bounds = array<i64: 28, 1>}, {pipeline_mode = #tpu.pipeline_mode<synchronous>, transform_indices = @transform_3, window_bounds = array<i64: 29, 28>}, {pipeline_mode = #tpu.pipeline_mode<synchronous>, transform_indices = @transform_4, window_bounds = array<i64: 29, 1>}, {pipeline_mode = #tpu.pipeline_mode<synchronous>, transform_indices = @transform_5, window_bounds = array<i64: 30, 29>}, {pipeline_mode = #tpu.pipeline_mode<synchronous>, transform_indices = @transform_6, window_bounds = array<i64: 30, 1>}, {pipeline_mode = #tpu.pipeline_mode<synchronous>, transform_indices = @transform_7, window_bounds = array<i64: 1, 30>}, {pipeline_mode = #tpu.pipeline_mode<synchronous>, transform_indices = @transform_8, window_bounds = array<i64: 1, 1>}, {transform_indices = @transform_9, window_bounds = array<i64: 1, 8>}]} {
    %c0 = arith.constant 0 : index
    %c0_0 = arith.constant 0 : index
    %0 = vector.load %arg1[%c0, %c0_0] : memref<8x6xf32, #tpu.memory_space<vmem>>, vector<8x6xf32>
    %1 = arith.truncf %0 : vector<8x6xf32> to vector<8x6xbf16>
    %c0_1 = arith.constant 0 : index
    %c0_2 = arith.constant 0 : index
    %2 = vector.load %arg2[%c0_1, %c0_2] : memref<28x6xbf16, #tpu.memory_space<vmem>>, vector<28x6xbf16>
    %cst = arith.constant dense<0.000000e+00> : vector<28x8xf32>
    %3 = tpu.matmul %2, %1, %cst {dimension_numbers = #tpu.dot_dimension_numbers<[1], [1], [0], [0], [0, 0, 1, 0], [], []>} : vector<28x6xbf16>, vector<8x6xbf16>, vector<28x8xf32> -> vector<28x8xf32>
    %c0_3 = arith.constant 0 : index
    %c0_4 = arith.constant 0 : index
    %4 = vector.load %arg3[%c0_3, %c0_4] : memref<28x1xf32, #tpu.memory_space<vmem>>, vector<28x1xf32>
    %5 = vector.broadcast %4 : vector<28x1xf32> to vector<28x8xf32>
    %6 = arith.addf %3, %5 : vector<28x8xf32>
    %cst_5 = arith.constant 0.000000e+00 : f32
    %7 = vector.broadcast %cst_5 : f32 to vector<28x8xf32>
    %8 = arith.maximumf %6, %7 : vector<28x8xf32>
    %9 = arith.truncf %8 : vector<28x8xf32> to vector<28x8xbf16>
    %c0_6 = arith.constant 0 : index
    %c0_7 = arith.constant 0 : index
    %10 = vector.load %arg4[%c0_6, %c0_7] : memref<29x28xbf16, #tpu.memory_space<vmem>>, vector<29x28xbf16>
    %cst_8 = arith.constant dense<0.000000e+00> : vector<29x8xf32>
    %11 = tpu.matmul %10, %9, %cst_8 {dimension_numbers = #tpu.dot_dimension_numbers<[1], [0], [0], [1], [0, 0, 1, 1], [], []>} : vector<29x28xbf16>, vector<28x8xbf16>, vector<29x8xf32> -> vector<29x8xf32>
    %c0_9 = arith.constant 0 : index
    %c0_10 = arith.constant 0 : index
    %12 = vector.load %arg5[%c0_9, %c0_10] : memref<29x1xf32, #tpu.memory_space<vmem>>, vector<29x1xf32>
    %13 = vector.broadcast %12 : vector<29x1xf32> to vector<29x8xf32>
    %14 = arith.addf %11, %13 : vector<29x8xf32>
    %cst_11 = arith.constant 0.000000e+00 : f32
    %15 = vector.broadcast %cst_11 : f32 to vector<29x8xf32>
    %16 = arith.maximumf %14, %15 : vector<29x8xf32>
    %17 = arith.truncf %16 : vector<29x8xf32> to vector<29x8xbf16>
    %c0_12 = arith.constant 0 : index
    %c0_13 = arith.constant 0 : index
    %18 = vector.load %arg6[%c0_12, %c0_13] : memref<30x29xbf16, #tpu.memory_space<vmem>>, vector<30x29xbf16>
    %cst_14 = arith.constant dense<0.000000e+00> : vector<30x8xf32>
    %19 = tpu.matmul %18, %17, %cst_14 {dimension_numbers = #tpu.dot_dimension_numbers<[1], [0], [0], [1], [0, 0, 1, 1], [], []>} : vector<30x29xbf16>, vector<29x8xbf16>, vector<30x8xf32> -> vector<30x8xf32>
    %c0_15 = arith.constant 0 : index
    %c0_16 = arith.constant 0 : index
    %20 = vector.load %arg7[%c0_15, %c0_16] : memref<30x1xf32, #tpu.memory_space<vmem>>, vector<30x1xf32>
    %21 = vector.broadcast %20 : vector<30x1xf32> to vector<30x8xf32>
    %22 = arith.addf %19, %21 : vector<30x8xf32>
    %cst_17 = arith.constant 0.000000e+00 : f32
    %23 = vector.broadcast %cst_17 : f32 to vector<30x8xf32>
    %24 = arith.maximumf %22, %23 : vector<30x8xf32>
    %25 = arith.truncf %24 : vector<30x8xf32> to vector<30x8xbf16>
    %c0_18 = arith.constant 0 : index
    %c0_19 = arith.constant 0 : index
    %26 = vector.load %arg8[%c0_18, %c0_19] : memref<1x30xbf16, #tpu.memory_space<vmem>>, vector<1x30xbf16>
    %cst_20 = arith.constant dense<0.000000e+00> : vector<1x8xf32>
    %27 = tpu.matmul %26, %25, %cst_20 {dimension_numbers = #tpu.dot_dimension_numbers<[1], [0], [0], [1], [0, 0, 1, 1], [], []>} : vector<1x30xbf16>, vector<30x8xbf16>, vector<1x8xf32> -> vector<1x8xf32>
    %c0_21 = arith.constant 0 : index
    %c0_22 = arith.constant 0 : index
    %28 = vector.load %arg9[%c0_21, %c0_22] : memref<1x1xf32, #tpu.memory_space<vmem>>, vector<1x1xf32>
    %29 = vector.broadcast %28 : vector<1x1xf32> to vector<1x8xf32>
    %30 = arith.addf %27, %29 : vector<1x8xf32>
    %c0_23 = arith.constant 0 : index
    %c0_24 = arith.constant 0 : index
    %31 = vector.load %arg10[%c0_23, %c0_24] : memref<1x8xf32, #tpu.memory_space<vmem>>, vector<1x8xf32>
    tpu.vector_store %arg10[%c0_23, %c0_24], %30 {strides = array<i32>} : memref<1x8xf32, #tpu.memory_space<vmem>>, vector<1x8xf32>,
    return
  }
  func.func @transform_0(%arg0: i32) -> (i32, i32) {
    %c0_i32 = arith.constant 0 : i32
    %c0_i32_0 = arith.constant 0 : i32
    return %arg0, %c0_i32 : i32, i32
  }
  func.func @transform_1(%arg0: i32) -> (i32, i32) {
    %c0_i32 = arith.constant 0 : i32
    %c0_i32_0 = arith.constant 0 : i32
    %c0_i32_1 = arith.constant 0 : i32
    return %c0_i32, %c0_i32_0 : i32, i32
  }
  func.func @transform_2(%arg0: i32) -> (i32, i32) {
    %c0_i32 = arith.constant 0 : i32
    %c0_i32_0 = arith.constant 0 : i32
    %c0_i32_1 = arith.constant 0 : i32
    return %c0_i32, %c0_i32_0 : i32, i32
  }
  func.func @transform_3(%arg0: i32) -> (i32, i32) {
    %c0_i32 = arith.constant 0 : i32
    %c0_i32_0 = arith.constant 0 : i32
    %c0_i32_1 = arith.constant 0 : i32
    return %c0_i32, %c0_i32_0 : i32, i32
  }
  func.func @transform_4(%arg0: i32) -> (i32, i32) {
    %c0_i32 = arith.constant 0 : i32
    %c0_i32_0 = arith.constant 0 : i32
    %c0_i32_1 = arith.constant 0 : i32
    return %c0_i32, %c0_i32_0 : i32, i32
  }
  func.func @transform_5(%arg0: i32) -> (i32, i32) {
    %c0_i32 = arith.constant 0 : i32
    %c0_i32_0 = arith.constant 0 : i32
    %c0_i32_1 = arith.constant 0 : i32
    return %c0_i32, %c0_i32_0 : i32, i32
  }
  func.func @transform_6(%arg0: i32) -> (i32, i32) {
    %c0_i32 = arith.constant 0 : i32
    %c0_i32_0 = arith.constant 0 : i32
    %c0_i32_1 = arith.constant 0 : i32
    return %c0_i32, %c0_i32_0 : i32, i32
  }
  func.func @transform_7(%arg0: i32) -> (i32, i32) {
    %c0_i32 = arith.constant 0 : i32
    %c0_i32_0 = arith.constant 0 : i32
    %c0_i32_1 = arith.constant 0 : i32
    return %c0_i32, %c0_i32_0 : i32, i32
  }
  func.func @transform_8(%arg0: i32) -> (i32, i32) {
    %c0_i32 = arith.constant 0 : i32
    %c0_i32_0 = arith.constant 0 : i32
    %c0_i32_1 = arith.constant 0 : i32
    return %c0_i32, %c0_i32_0 : i32, i32
  }
  func.func @transform_9(%arg0: i32) -> (i32, i32) {
    %c0_i32 = arith.constant 0 : i32
    %c0_i32_0 = arith.constant 0 : i32
    return %c0_i32, %arg0 : i32, i32
  }
}

</mosaic_0001>

<llo_original>
// kernel: tpu_custom_call.1
$region0: #{tpu_custom_call.1}
  #allocation0 [shape = 'u32[]', space=smem, size = 0x4, offset = 0x4, fixed_abs, tag = 'smem constant byte address 0x4 - core index']
  #allocation1 [shape = 'u32[144,128]{1,0:T(1,128)}', space=vmem, size = 0x12000, scoped, tag = 'internal scratch']
  #allocation2 [shape = 'f32[1,1]{1,0:T(1,128)S(1)}', space=vmem, size = 0x200, scoped, tag = 'scoped memory for tpu_custom_call.1']
  %s0 = inlined_call_operand.vmem [shape: f32[8,6], index: 0, kind: input, shape index: {}]
  %s1 = inlined_call_operand.vmem [shape: bf16[28,6], index: 1, kind: input, shape index: {}]
  %s2 = inlined_call_operand.vmem [shape: f32[28,1], index: 2, kind: input, shape index: {}]
  %s3 = inlined_call_operand.vmem [shape: bf16[29,28], index: 3, kind: input, shape index: {}]
  %s4 = inlined_call_operand.vmem [shape: f32[29,1], index: 4, kind: input, shape index: {}]
  %s5 = inlined_call_operand.vmem [shape: bf16[30,29], index: 5, kind: input, shape index: {}]
  %s6 = inlined_call_operand.vmem [shape: f32[30,1], index: 6, kind: input, shape index: {}]
  %s7 = inlined_call_operand.vmem [shape: bf16[1,30], index: 7, kind: input, shape index: {}]
  %s8 = inlined_call_operand.<no memory space> [shape: f32[1,1], index: 8, kind: input, shape index: {}]
  %s9 = inlined_call_operand.hbm [shape: f32[1,8], index: 9, kind: output, shape index: {}]
  %s10 = sld [smem:[#allocation0]]
  $region46: #{tpu_custom_call.1} parent=0
    _
  %s12 = ssub.s32 1, %s10
  %s13 = scalar_select 0, %s12, %s10
  %v14 = vstv %s8
  %15 = vst [vmem:[#allocation2] sm:$0x1] %v14
  $region1: #{tpu_custom_call.1} parent=0
    #allocation3 [shape = 'u8[512]{0}', space=vmem, size = 0x400, scoped, tag = 'output window, operand 0, single buffered']
    #allocation4 [shape = 's32[1]{0}', space=sflag, size = 0x4, scoped, tag = 'scoped memory for tpu_custom_call.1']
    %16 = vsyncpa [#allocation4], 0
    // Predicated region
    $region2: #{tpu_custom_call.1} parent=1 // pred_check
      _
    $region3: #{tpu_custom_call.1} parent=1 // pred_check_branch
      %18 = sbr.rel (0) target = $region5
    $region4: #{tpu_custom_call.1} parent=1 // pred_region
      _
    $region5: #{tpu_custom_call.1} parent=1 // pred_fallthru
      _
    // Predicated region
    $region6: #{tpu_custom_call.1} parent=1 // pred_check
      _
    $region7: #{tpu_custom_call.1} parent=1 // pred_check_branch
      %20 = sbr.rel (0) target = $region9
    $region8: #{tpu_custom_call.1} parent=1 // pred_region
      _
    $region9: #{tpu_custom_call.1} parent=1 // pred_fallthru
      _
    // Predicated region
    $region10: #{tpu_custom_call.1} parent=1 // pred_check
      _
    $region11: #{tpu_custom_call.1} parent=1 // pred_check_branch
      %22 = sbr.rel (0) target = $region13
    $region12: #{tpu_custom_call.1} parent=1 // pred_region
      _
    $region13: #{tpu_custom_call.1} parent=1 // pred_fallthru
      _
    // Predicated region
    $region14: #{tpu_custom_call.1} parent=1 // pred_check
      _
    $region15: #{tpu_custom_call.1} parent=1 // pred_check_branch
      %24 = sbr.rel (0) target = $region17
    $region16: #{tpu_custom_call.1} parent=1 // pred_region
      _
    $region17: #{tpu_custom_call.1} parent=1 // pred_fallthru
      _
    // Predicated region
    $region18: #{tpu_custom_call.1} parent=1 // pred_check
      _
    $region19: #{tpu_custom_call.1} parent=1 // pred_check_branch
      %26 = sbr.rel (0) target = $region21
    $region20: #{tpu_custom_call.1} parent=1 // pred_region
      _
    $region21: #{tpu_custom_call.1} parent=1 // pred_fallthru
      _
    // Predicated region
    $region22: #{tpu_custom_call.1} parent=1 // pred_check
      _
    $region23: #{tpu_custom_call.1} parent=1 // pred_check_branch
      %28 = sbr.rel (0) target = $region25
    $region24: #{tpu_custom_call.1} parent=1 // pred_region
      _
    $region25: #{tpu_custom_call.1} parent=1 // pred_fallthru
      _
    // Predicated region
    $region26: #{tpu_custom_call.1} parent=1 // pred_check
      _
    $region27: #{tpu_custom_call.1} parent=1 // pred_check_branch
      %30 = sbr.rel (0) target = $region29
    $region28: #{tpu_custom_call.1} parent=1 // pred_region
      _
    $region29: #{tpu_custom_call.1} parent=1 // pred_fallthru
      _
    // Predicated region
    $region30: #{tpu_custom_call.1} parent=1 // pred_check
      _
    $region31: #{tpu_custom_call.1} parent=1 // pred_check_branch
      %32 = sbr.rel (0) target = $region33
    $region32: #{tpu_custom_call.1} parent=1 // pred_region
      _
    $region33: #{tpu_custom_call.1} parent=1 // pred_fallthru
      _
    // Predicated region
    $region34: #{tpu_custom_call.1} parent=1 // pred_check
      _
    $region35: #{tpu_custom_call.1} parent=1 // pred_check_branch
      %34 = sbr.rel (0) target = $region37
    $region36: #{tpu_custom_call.1} parent=1 // pred_region
      _
    $region37: #{tpu_custom_call.1} parent=1 // pred_fallthru
      _
    %v36 = vld [vmem:[%s0] sm:$0xff]
    %v37 = vpack.c.bf16 %v36, %v36
    %v38 = vld [vmem:[%s1] sm:$0xf]
    %v39 = vld [vmem:[%s1 + $0x4] sm:$0xf]
    %v40 = vld [vmem:[%s1 + $0x8] sm:$0xf]
    %v41 = vld [vmem:[%s1 + $0xc] sm:$0x3]
    %v42 = vld [vmem:[%s2] sm:$0xff]
    %v43 = vld [vmem:[%s2 + $0x8] sm:$0xff]
    %v44 = vld [vmem:[%s2 + $0x10] sm:$0xff]
    %v45 = vld [vmem:[%s2 + $0x18] sm:$0xf]
    %47 = vset.pattern.permute.xlu0 0
    %48 = vperm.xlu0 %47, %v42
    %v49 = vpop.permute.xlu0 %48
    %52 = vset.pattern.permute.xlu0 0
    %53 = vperm.xlu0 %52, %v43
    %v54 = vpop.permute.xlu0 %53
    %57 = vset.pattern.permute.xlu0 0
    %58 = vperm.xlu0 %57, %v44
    %v59 = vpop.permute.xlu0 %58
    %62 = vset.pattern.permute.xlu0 0
    %63 = vperm.xlu0 %62, %v45
    %v64 = vpop.permute.xlu0 %63
    %v70 = vunpack.c.l.b16 %v38
    %v71 = vunpack.c.l.b16 %v39
    %v72 = vunpack.c.l.b16 %v40
    %v73 = vunpack.c.l.b16 %v41
    %v74 = vpack.c.b16 %v71, %v70
    %v75 = vpack.c.b16 %v73, %v72
    %vm76 = vcmask 48128
    %v78 = vsel %vm76, %v74, 0
    %v81 = vsel %vm76, %v75, 0
    %v84 = vsel %vm76, %v37, 0
    %86 = vmatprep.subr.bf16.mxu0 0
    %87 = vmatpush1.bf16.xpose.msra.mxu0 %v84
    %88 = vmatprep.subr.bf16.mxu0 0
    %89 = vmatpush1.bf16.xpose.msra.mxu0 0
    %90 = vmatprep.subr.bf16.mxu0 0
    %91 = vmatpush1.bf16.xpose.msra.mxu0 0
    %92 = vmatprep.subr.bf16.mxu0 0
    %93 = vmatpush1.bf16.xpose.msra.mxu0 0
    %94 = vmatprep.subr.bf16.mxu0 0
    %95 = vmatpush1.bf16.xpose.msra.mxu0 0
    %96 = vmatprep.subr.bf16.mxu0 0
    %97 = vmatpush1.bf16.xpose.msra.mxu0 0
    %98 = vmatprep.subr.bf16.mxu0 0
    %99 = vmatpush1.bf16.xpose.msra.mxu0 0
    %100 = vmatprep.subr.bf16.mxu0 0
    %101 = vmatpush1.bf16.xpose.msra.mxu0 0
    %102 = vmatprep.subr.bf16.mxu0 0
    %103 = vmatpush1.bf16.xpose.msra.mxu0 0
    %104 = vmatprep.subr.bf16.mxu0 0
    %105 = vmatpush1.bf16.xpose.msra.mxu0 0
    %106 = vmatprep.subr.bf16.mxu0 0
    %107 = vmatpush1.bf16.xpose.msra.mxu0 0
    %108 = vmatprep.subr.bf16.mxu0 0
    %109 = vmatpush1.bf16.xpose.msra.mxu0 0
    %110 = vmatprep.subr.bf16.mxu0 0
    %111 = vmatpush1.bf16.xpose.msra.mxu0 0
    %112 = vmatprep.subr.bf16.mxu0 0
    %113 = vmatpush1.bf16.xpose.msra.mxu0 0
    %114 = vmatprep.subr.bf16.mxu0 0
    %115 = vmatpush1.bf16.xpose.msra.mxu0 0
    %116 = vmatprep.subr.bf16.mxu0 0
    %117 = vmatpush1.bf16.xpose.msra.mxu0 0
    %118 = vmatprep.mubr.bf16.mxu0 0
    %119 = vmatmul.mubr.bf16.gmra.mrb[0].mxu0 %v78
    %v120 = vpop.f32.mrb[0].mxu0
    %v121 = vadd.f32 %v49, %v120
    %v122 = vpop.f32.mrb[0].mxu0
    %v123 = vpop.f32.mrb[0].mxu0
    %v124 = vadd.f32 %v54, %v123
    %v125 = vpop.f32.mrb[0].mxu0
    %126 = vmatprep.mubr.bf16.mxu0 0
    %127 = vmatmul.mubr.bf16.gmra.mrb[0].mxu0 %v81
    %v128 = vpop.f32.mrb[0].mxu0
    %v129 = vadd.f32 %v59, %v128
    %v130 = vpop.f32.mrb[0].mxu0
    %v131 = vpop.f32.mrb[0].mxu0
    %v132 = vadd.f32 %v64, %v131
    %v133 = vpop.f32.mrb[0].mxu0
    %134 = vdwg.mxu0
    %v135 = vmax.f32 %v121, 0.0
    %v136 = vmax.f32 %v124, 0.0
    %v137 = vmax.f32 %v129, 0.0
    %v138 = vmax.f32 %v132, 0.0
    %v139 = vpack.c.bf16 %v136, %v135
    %v140 = vpack.c.bf16 %v138, %v137
    %v141 = vld [vmem:[%s3] sm:$0xf]
    %v142 = vld [vmem:[%s3 + $0x4] sm:$0xf]
    %v143 = vld [vmem:[%s3 + $0x8] sm:$0xf]
    %v144 = vld [vmem:[%s3 + $0xc] sm:$0x7]
    %v145 = vld [vmem:[%s4] sm:$0xff]
    %v146 = vld [vmem:[%s4 + $0x8] sm:$0xff]
    %v147 = vld [vmem:[%s4 + $0x10] sm:$0xff]
    %v148 = vld [vmem:[%s4 + $0x18] sm:$0x1f]
    %150 = vset.pattern.permute.xlu0 0
    %151 = vperm.xlu0 %150, %v145
    %v152 = vpop.permute.xlu0 %151
    %155 = vset.pattern.permute.xlu0 0
    %156 = vperm.xlu0 %155, %v146
    %v157 = vpop.permute.xlu0 %156
    %160 = vset.pattern.permute.xlu0 0
    %161 = vperm.xlu0 %160, %v147
    %v162 = vpop.permute.xlu0 %161
    %165 = vset.pattern.permute.xlu0 0
    %166 = vperm.xlu0 %165, %v148
    %v167 = vpop.permute.xlu0 %166
    %v173 = vunpack.c.l.b16 %v141
    %v174 = vunpack.c.l.b16 %v142
    %v175 = vunpack.c.l.b16 %v143
    %v176 = vunpack.c.l.b16 %v144
    %v177 = vpack.c.b16 %v174, %v173
    %v178 = vpack.c.b16 %v176, %v175
    %vm179 = vcmask 228352
    %v181 = vsel %vm179, %v177, 0
    %v184 = vsel %vm179, %v178, 0
    %vm186 = vcmask 1045504
    %v188 = vsel %vm186, %v140, 0
    %190 = vmatprep.subr.bf16.mxu0 0
    %191 = vmatpush1.bf16.msra.mxu0 %v139
    %192 = vmatprep.subr.bf16.mxu0 0
    %193 = vmatpush1.bf16.msra.mxu0 %v188
    %194 = vmatprep.subr.bf16.mxu0 0
    %195 = vmatpush1.bf16.msra.mxu0 0
    %196 = vmatprep.subr.bf16.mxu0 0
    %197 = vmatpush1.bf16.msra.mxu0 0
    %198 = vmatprep.subr.bf16.mxu0 0
    %199 = vmatpush1.bf16.msra.mxu0 0
    %200 = vmatprep.subr.bf16.mxu0 0
    %201 = vmatpush1.bf16.msra.mxu0 0
    %202 = vmatprep.subr.bf16.mxu0 0
    %203 = vmatpush1.bf16.msra.mxu0 0
    %204 = vmatprep.subr.bf16.mxu0 0
    %205 = vmatpush1.bf16.msra.mxu0 0
    %206 = vmatprep.subr.bf16.mxu0 0
    %207 = vmatpush1.bf16.msra.mxu0 0
    %208 = vmatprep.subr.bf16.mxu0 0
    %209 = vmatpush1.bf16.msra.mxu0 0
    %210 = vmatprep.subr.bf16.mxu0 0
    %211 = vmatpush1.bf16.msra.mxu0 0
    %212 = vmatprep.subr.bf16.mxu0 0
    %213 = vmatpush1.bf16.msra.mxu0 0
    %214 = vmatprep.subr.bf16.mxu0 0
    %215 = vmatpush1.bf16.msra.mxu0 0
    %216 = vmatprep.subr.bf16.mxu0 0
    %217 = vmatpush1.bf16.msra.mxu0 0
    %218 = vmatprep.subr.bf16.mxu0 0
    %219 = vmatpush1.bf16.msra.mxu0 0
    %220 = vmatprep.subr.bf16.mxu0 0
    %221 = vmatpush1.bf16.msra.mxu0 0
    %222 = vmatprep.mubr.bf16.mxu0 0
    %223 = vmatmul.mubr.bf16.gmra.mrb[0].mxu0 %v181
    %v224 = vpop.f32.mrb[0].mxu0
    %v225 = vadd.f32 %v152, %v224
    %v226 = vpop.f32.mrb[0].mxu0
    %v227 = vpop.f32.mrb[0].mxu0
    %v228 = vadd.f32 %v157, %v227
    %v229 = vpop.f32.mrb[0].mxu0
    %230 = vmatprep.mubr.bf16.mxu0 0
    %231 = vmatmul.mubr.bf16.gmra.mrb[0].mxu0 %v184
    %v232 = vpop.f32.mrb[0].mxu0
    %v233 = vadd.f32 %v162, %v232
    %v234 = vpop.f32.mrb[0].mxu0
    %v235 = vpop.f32.mrb[0].mxu0
    %v236 = vadd.f32 %v167, %v235
    %v237 = vpop.f32.mrb[0].mxu0
    %238 = vdwg.mxu0
    %v239 = vmax.f32 %v225, 0.0
    %v240 = vmax.f32 %v228, 0.0
    %v241 = vmax.f32 %v233, 0.0
    %v242 = vmax.f32 %v236, 0.0
    %v243 = vpack.c.bf16 %v240, %v239
    %v244 = vpack.c.bf16 %v242, %v241
    %v245 = vld [vmem:[%s5] sm:$0xf]
    %v246 = vld [vmem:[%s5 + $0x4] sm:$0xf]
    %v247 = vld [vmem:[%s5 + $0x8] sm:$0xf]
    %v248 = vld [vmem:[%s5 + $0xc] sm:$0x7]
    %v249 = vld [vmem:[%s6] sm:$0xff]
    %v250 = vld [vmem:[%s6 + $0x8] sm:$0xff]
    %v251 = vld [vmem:[%s6 + $0x10] sm:$0xff]
    %v252 = vld [vmem:[%s6 + $0x18] sm:$0x3f]
    %254 = vset.pattern.permute.xlu0 0
    %255 = vperm.xlu0 %254, %v249
    %v256 = vpop.permute.xlu0 %255
    %259 = vset.pattern.permute.xlu0 0
    %260 = vperm.xlu0 %259, %v250
    %v261 = vpop.permute.xlu0 %260
    %264 = vset.pattern.permute.xlu0 0
    %265 = vperm.xlu0 %264, %v251
    %v266 = vpop.permute.xlu0 %265
    %269 = vset.pattern.permute.xlu0 0
    %270 = vperm.xlu0 %269, %v252
    %v271 = vpop.permute.xlu0 %270
    %v277 = vunpack.c.l.b16 %v245
    %v278 = vunpack.c.l.b16 %v246
    %v279 = vunpack.c.l.b16 %v247
    %v280 = vunpack.c.l.b16 %v248
    %v281 = vpack.c.b16 %v278, %v277
    %v282 = vpack.c.b16 %v280, %v279
    %vm283 = vcmask 236544
    %v285 = vsel %vm283, %v281, 0
    %v288 = vsel %vm283, %v282, 0
    %vm290 = vcmask 1046528
    %v291 = vsel %vm186, 4294967295, 65535
    %v292 = vsel %vm290, %v291, 0
    %v294 = vand.u32 %v244, %v292
    %296 = vmatprep.subr.bf16.mxu0 0
    %297 = vmatpush1.bf16.msra.mxu0 %v243
    %298 = vmatprep.subr.bf16.mxu0 0
    %299 = vmatpush1.bf16.msra.mxu0 %v294
    %300 = vmatprep.subr.bf16.mxu0 0
    %301 = vmatpush1.bf16.msra.mxu0 0
    %302 = vmatprep.subr.bf16.mxu0 0
    %303 = vmatpush1.bf16.msra.mxu0 0
    %304 = vmatprep.subr.bf16.mxu0 0
    %305 = vmatpush1.bf16.msra.mxu0 0
    %306 = vmatprep.subr.bf16.mxu0 0
    %307 = vmatpush1.bf16.msra.mxu0 0
    %308 = vmatprep.subr.bf16.mxu0 0
    %309 = vmatpush1.bf16.msra.mxu0 0
    %310 = vmatprep.subr.bf16.mxu0 0
    %311 = vmatpush1.bf16.msra.mxu0 0
    %312 = vmatprep.subr.bf16.mxu0 0
    %313 = vmatpush1.bf16.msra.mxu0 0
    %314 = vmatprep.subr.bf16.mxu0 0
    %315 = vmatpush1.bf16.msra.mxu0 0
    %316 = vmatprep.subr.bf16.mxu0 0
    %317 = vmatpush1.bf16.msra.mxu0 0
    %318 = vmatprep.subr.bf16.mxu0 0
    %319 = vmatpush1.bf16.msra.mxu0 0
    %320 = vmatprep.subr.bf16.mxu0 0
    %321 = vmatpush1.bf16.msra.mxu0 0
    %322 = vmatprep.subr.bf16.mxu0 0
    %323 = vmatpush1.bf16.msra.mxu0 0
    %324 = vmatprep.subr.bf16.mxu0 0
    %325 = vmatpush1.bf16.msra.mxu0 0
    %326 = vmatprep.subr.bf16.mxu0 0
    %327 = vmatpush1.bf16.msra.mxu0 0
    %328 = vmatprep.mubr.bf16.mxu0 0
    %329 = vmatmul.mubr.bf16.gmra.mrb[0].mxu0 %v285
    %v330 = vpop.f32.mrb[0].mxu0
    %v331 = vadd.f32 %v256, %v330
    %v332 = vpop.f32.mrb[0].mxu0
    %v333 = vpop.f32.mrb[0].mxu0
    %v334 = vadd.f32 %v261, %v333
    %v335 = vpop.f32.mrb[0].mxu0
    %336 = vmatprep.mubr.bf16.mxu0 0
    %337 = vmatmul.mubr.bf16.gmra.mrb[0].mxu0 %v288
    %v338 = vpop.f32.mrb[0].mxu0
    %v339 = vadd.f32 %v266, %v338
    %v340 = vpop.f32.mrb[0].mxu0
    %v341 = vpop.f32.mrb[0].mxu0
    %v342 = vadd.f32 %v271, %v341
    %v343 = vpop.f32.mrb[0].mxu0
    %344 = vdwg.mxu0
    %v345 = vmax.f32 %v331, 0.0
    %v346 = vmax.f32 %v334, 0.0
    %v347 = vmax.f32 %v339, 0.0
    %v348 = vmax.f32 %v342, 0.0
    %v349 = vpack.c.bf16 %v346, %v345
    %v350 = vpack.c.bf16 %v348, %v347
    %v351 = vld [vmem:[%s7] sm:$0x1]
    %v352 = vld [vmem:[#allocation2] sm:$0x1]
    %354 = vset.pattern.permute.xlu0 0
    %355 = vperm.xlu0 %354, %v352
    %v356 = vpop.permute.xlu0 %355
    %v358 = vlaneseq
    %v359 = vshrl.u32 %v358, 7
    %v360 = vsub.s32 0, %v359
    %v361 = vrot.slane %v356, %v360
    %vm362 = vcmask 244736
    %v364 = vsel %vm362, %v351, 0
    %v367 = vsel %vm290, %v350, 0
    %369 = vmatprep.subr.bf16.mxu0 0
    %370 = vmatpush1.bf16.msra.mxu0 %v349
    %371 = vmatprep.subr.bf16.mxu0 0
    %372 = vmatpush1.bf16.msra.mxu0 %v367
    %373 = vmatprep.subr.bf16.mxu0 0
    %374 = vmatpush1.bf16.msra.mxu0 0
    %375 = vmatprep.subr.bf16.mxu0 0
    %376 = vmatpush1.bf16.msra.mxu0 0
    %377 = vmatprep.subr.bf16.mxu0 0
    %378 = vmatpush1.bf16.msra.mxu0 0
    %379 = vmatprep.subr.bf16.mxu0 0
    %380 = vmatpush1.bf16.msra.mxu0 0
    %381 = vmatprep.subr.bf16.mxu0 0
    %382 = vmatpush1.bf16.msra.mxu0 0
    %383 = vmatprep.subr.bf16.mxu0 0
    %384 = vmatpush1.bf16.msra.mxu0 0
    %385 = vmatprep.subr.bf16.mxu0 0
    %386 = vmatpush1.bf16.msra.mxu0 0
    %387 = vmatprep.subr.bf16.mxu0 0
    %388 = vmatpush1.bf16.msra.mxu0 0
    %389 = vmatprep.subr.bf16.mxu0 0
    %390 = vmatpush1.bf16.msra.mxu0 0
    %391 = vmatprep.subr.bf16.mxu0 0
    %392 = vmatpush1.bf16.msra.mxu0 0
    %393 = vmatprep.subr.bf16.mxu0 0
    %394 = vmatpush1.bf16.msra.mxu0 0
    %395 = vmatprep.subr.bf16.mxu0 0
    %396 = vmatpush1.bf16.msra.mxu0 0
    %397 = vmatprep.subr.bf16.mxu0 0
    %398 = vmatpush1.bf16.msra.mxu0 0
    %399 = vmatprep.subr.bf16.mxu0 0
    %400 = vmatpush1.bf16.msra.mxu0 0
    %401 = vmatprep.mubr.bf16.mxu0 0
    %402 = vmatmul.mubr.bf16.gmra.mrb[0].mxu0 %v364
    %v403 = vpop.f32.mrb[0].mxu0
    %v404 = vadd.f32 %v361, %v403
    %v405 = vpop.f32.mrb[0].mxu0
    %v406 = vpop.f32.mrb[0].mxu0
    %v407 = vpop.f32.mrb[0].mxu0
    %408 = vdwg.mxu0
    %vm409 = vcmask 57344
    %410 = vst.msk [vmem:[#allocation3] sm:$0x1] %vm409, %v404
    // Predicated region
    $region38: #{tpu_custom_call.1} parent=1 // pred_check
      _
    $region39: #{tpu_custom_call.1} parent=1 // pred_check_branch
      %412 = sbr.rel (0) target = $region41
    $region40: #{tpu_custom_call.1} parent=1 // pred_region
      %s414 = ssub.s32 16, 16
      %415 = vsyncadd [#allocation4], %s414
      %s417 = sshll.u32 [#allocation3], 4
      %s418 = int_to_ptr.vmem [resolvable:$true] %s417
      %420 = dma.vmem_to_hbm [thread:$0]  %s418, 16, %s9, [#allocation4]
    $region41: #{tpu_custom_call.1} parent=1 // pred_fallthru
      _
    // Predicated region
    $region42: #{tpu_custom_call.1} parent=1 // pred_check
      _
    $region43: #{tpu_custom_call.1} parent=1 // pred_check_branch
      %422 = sbr.rel (0) target = $region45
    $region44: #{tpu_custom_call.1} parent=1 // pred_region
      %423 = dma.done [#allocation4], 16
    $region45: #{tpu_custom_call.1} parent=1 // pred_fallthru
      _
    %424 = vsyncpa [#allocation4], 1

</llo_original>
